<compile_context>
chip_gen: v6e
topology: v6e:2x2x1
jax: 0.10.0
libtpu: 0.0.40
codegen_flags: <defaults>
</compile_context>

<pallas_src>
import jax
import jax.numpy as jnp
from jax.experimental import pallas as pl
from jax.experimental.pallas import tpu as pltpu


def net1_kernel(x_ref, w1_ref, b1_ref, w2_ref, b2_ref, o_ref):
    # x_ref: (TILE_B, F) row-major block, straight from HBM (single pass).
    # Layer 1 on the MXU with the transpose folded into the dot:
    #   h^T = relu(W1 @ x^T + b1)                          -> (H, TILE_B)
    h = jnp.dot(w1_ref[...], x_ref[...].T, preferred_element_type=jnp.float32)
    h = jnp.maximum(h + b1_ref[...], 0.0)          # b1: (H, 1) broadcast on lanes
    # Dropout: identity (eval mode).

    # Layer 2 as VPU mul + XLU sublane-reduce (avoid an N=1 MXU matmul):
    #   y^T = relu(sum_H(w2 * h^T) + b2)                   -> (1, TILE_B), lane-dense
    y = jnp.sum(h * w2_ref[...], axis=0, keepdims=True) + b2_ref[...]
    o_ref[...] = jnp.maximum(y, 0.0).astype(o_ref.dtype)   # single relu (idempotent)


def _round_up(n, m):
    return ((n + m - 1) // m) * m


def net1_forward(x, w1, b1, w2, b2, *, tile_b=16384, min_pallas_batch=1024):
    """x: (B, n_features), f32 (or bf16 for half the HBM traffic).
    w1: (H, F)  b1: (H, 1)  w2: (H, 1)  b2: (1, 1)
    NOTE: PyTorch `output.weight` is (1, H); transpose it to (H, 1) when
    loading real checkpoints or results silently diverge.
    Returns (B, 1) f32.
    """
    B, F = x.shape
    H = w1.shape[0]

    # Small-batch fallback: below ~16K input elements the fixed pallas_call /
    # grid overheads dominate and XLA's fused matmul path is faster.
    if B < min_pallas_batch:
        return net1_reference(x, w1, b1, w2, b2).astype(jnp.float32)

    # Batch tile selection:
    #   * lane-dense output tiles (multiple of 128), unless B itself is tiny,
    #   * at least 2 grid steps so v7x's two TensorCores both get work,
    #   * default 16384 keeps VMEM ~23 MiB (x block pads 20 -> 128 lanes).
    if B <= 128:
        tile = B
    else:
        tile = min(tile_b, _round_up(pl.cdiv(B, 2), 128))
    grid = (pl.cdiv(B, tile),)

    # Match the MXU operand dtype to x (bf16 x => bf16 W1, f32 accumulation).
    w1 = w1.astype(x.dtype)
    b1 = b1.astype(jnp.float32)
    w2 = w2.astype(jnp.float32)
    b2 = b2.astype(jnp.float32)

    yt = pl.pallas_call(
        net1_kernel,
        out_shape=jax.ShapeDtypeStruct((1, B), jnp.float32),
        grid_spec=pltpu.PrefetchScalarGridSpec(
            num_scalar_prefetch=0,
            grid=grid,
            in_specs=[
                pl.BlockSpec((tile, F), lambda i: (i, 0)),   # x row-block (pipelined)
                pl.BlockSpec((H, F), lambda i: (0, 0)),      # W1 resident in VMEM
                pl.BlockSpec((H, 1), lambda i: (0, 0)),      # b1 resident
                pl.BlockSpec((H, 1), lambda i: (0, 0)),      # w2 resident
                pl.BlockSpec((1, 1), lambda i: (0, 0)),      # b2 resident
            ],
            out_specs=pl.BlockSpec((1, tile), lambda i: (0, i)),
        ),
        compiler_params=pltpu.CompilerParams(
            dimension_semantics=("parallel",),       # shard batch axis across TCs
            vmem_limit_bytes=48 * 1024 * 1024,       # safe on v7x's 64 MiB VMEM
        ),
    )(x, w1, b1, w2, b2)

    # (1, B) -> (B, 1); one dim is 1 so this reshape is free (no data movement).
    return yt.reshape(B, 1)


def init_params(key, n_features=20, nhidden1=20):
    """Deterministic init, PyTorch-Linear-style uniform bounds & layouts."""
    k1, k2, k3, k4 = jax.random.split(key, 4)
    bound1 = 1.0 / jnp.sqrt(n_features)
    bound2 = 1.0 / jnp.sqrt(nhidden1)
    w1 = jax.random.uniform(k1, (nhidden1, n_features), jnp.float32, -bound1, bound1)
    b1 = jax.random.uniform(k2, (nhidden1, 1), jnp.float32, -bound1, bound1)
    w2 = jax.random.uniform(k3, (nhidden1, 1), jnp.float32, -bound2, bound2)
    b2 = jax.random.uniform(k4, (1, 1), jnp.float32, -bound2, bound2)
    return w1, b1, w2, b2


def net1_reference(x, w1, b1, w2, b2):
    """Pure-JAX reference (eval-mode Net1 forward)."""
    xf = x.astype(jnp.float32)
    h = jnp.maximum(xf @ w1.astype(jnp.float32).T + b1.reshape(1, -1), 0.0)
    y = jnp.maximum(h @ w2 + b2.reshape(1, 1), 0.0)
    return y


if __name__ == "__main__":
    key = jax.random.PRNGKey(0)
    kx1, kx2, kp = jax.random.split(key, 3)

    n_features, nhidden1 = 20, 20
    w1, b1, w2, b2 = init_params(kp, n_features, nhidden1)

    # 1) Small batch, kernel forced (min_pallas_batch=0): exercises the
    #    single partial-block path of the Pallas kernel.
    x_small = jax.random.normal(kx1, (8, n_features), dtype=jnp.float32)
    out_small = jax.block_until_ready(
        net1_forward(x_small, w1, b1, w2, b2, min_pallas_batch=0))
    ref_small = net1_reference(x_small, w1, b1, w2, b2)
    assert out_small.shape == (8, 1)
    assert jnp.allclose(out_small, ref_small, atol=1e-4, rtol=1e-4)

    # 2) Medium batch (default path): exercises the multi-step pipelined grid
    #    (tile capped so grid has >= 2 steps).
    x_med = jax.random.normal(kx2, (4096, n_features), dtype=jnp.float32)
    out_med = jax.block_until_ready(net1_forward(x_med, w1, b1, w2, b2))
    ref_med = net1_reference(x_med, w1, b1, w2, b2)
    assert out_med.shape == (4096, 1)
    assert jnp.allclose(out_med, ref_med, atol=1e-4, rtol=1e-4)

    # 3) Tiny batch through the small-batch fallback (pure-JAX path).
    out_fb = jax.block_until_ready(net1_forward(x_small, w1, b1, w2, b2))
    assert out_fb.shape == (8, 1)
    assert jnp.allclose(out_fb, ref_small, atol=1e-5, rtol=1e-5)

    print("KERNEL_OK")
</pallas_src>

<mosaic_0001>
module attributes {stable_mosaic.version = 11 : i64} {
  func.func @net1_kernel(%arg0: i32, %arg1: memref<8x20xf32, #tpu.memory_space<vmem>>, %arg2: memref<20x20xf32, #tpu.memory_space<vmem>>, %arg3: memref<20x1xf32, #tpu.memory_space<vmem>>, %arg4: memref<20x1xf32, #tpu.memory_space<vmem>>, %arg5: memref<1x1xf32, #tpu.memory_space<vmem>>, %arg6: memref<1x8xf32, #tpu.memory_space<vmem>>) attributes {dimension_semantics = [#tpu.dimension_semantics<parallel>], iteration_bounds = array<i64: 1>, scalar_prefetch = 0 : i64, scratch_operands = 0 : i64, tpu.core_type = #tpu.core_type<tc>, window_params = [{transform_indices = @transform_0, window_bounds = array<i64: 8, 20>}, {pipeline_mode = #tpu.pipeline_mode<synchronous>, transform_indices = @transform_1, window_bounds = array<i64: 20, 20>}, {pipeline_mode = #tpu.pipeline_mode<synchronous>, transform_indices = @transform_2, window_bounds = array<i64: 20, 1>}, {pipeline_mode = #tpu.pipeline_mode<synchronous>, transform_indices = @transform_3, window_bounds = array<i64: 20, 1>}, {pipeline_mode = #tpu.pipeline_mode<synchronous>, transform_indices = @transform_4, window_bounds = array<i64: 1, 1>}, {transform_indices = @transform_5, window_bounds = array<i64: 1, 8>}]} {
    %c0 = arith.constant 0 : index
    %c0_0 = arith.constant 0 : index
    %0 = vector.load %arg2[%c0, %c0_0] : memref<20x20xf32, #tpu.memory_space<vmem>>, vector<20x20xf32>
    %c0_1 = arith.constant 0 : index
    %c0_2 = arith.constant 0 : index
    %1 = vector.load %arg1[%c0_1, %c0_2] : memref<8x20xf32, #tpu.memory_space<vmem>>, vector<8x20xf32>
    %2 = tpu.transpose %1, [1, 0] : vector<8x20xf32> -> vector<20x8xf32>
    %cst = arith.constant dense<0.000000e+00> : vector<20x8xf32>
    %3 = tpu.matmul %0, %2, %cst {dimension_numbers = #tpu.dot_dimension_numbers<[1], [0], [0], [1], [0, 0, 1, 1], [], []>} : vector<20x20xf32>, vector<20x8xf32>, vector<20x8xf32> -> vector<20x8xf32>
    %c0_3 = arith.constant 0 : index
    %c0_4 = arith.constant 0 : index
    %4 = vector.load %arg3[%c0_3, %c0_4] : memref<20x1xf32, #tpu.memory_space<vmem>>, vector<20x1xf32>
    %5 = vector.broadcast %4 : vector<20x1xf32> to vector<20x8xf32>
    %6 = arith.addf %3, %5 : vector<20x8xf32>
    %cst_5 = arith.constant 0.000000e+00 : f32
    %7 = vector.broadcast %cst_5 : f32 to vector<20x8xf32>
    %8 = arith.maximumf %6, %7 : vector<20x8xf32>
    %c0_6 = arith.constant 0 : index
    %c0_7 = arith.constant 0 : index
    %9 = vector.load %arg4[%c0_6, %c0_7] : memref<20x1xf32, #tpu.memory_space<vmem>>, vector<20x1xf32>
    %10 = vector.broadcast %9 : vector<20x1xf32> to vector<20x8xf32>
    %11 = arith.mulf %8, %10 : vector<20x8xf32>
    %cst_8 = arith.constant dense<0.000000e+00> : vector<8xf32>
    %12 = vector.multi_reduction <add>, %11, %cst_8 [0] : vector<20x8xf32> to vector<8xf32>
    %13 = vector.shape_cast %12 : vector<8xf32> to vector<1x8xf32>
    %c0_9 = arith.constant 0 : index
    %c0_10 = arith.constant 0 : index
    %14 = vector.load %arg5[%c0_9, %c0_10] : memref<1x1xf32, #tpu.memory_space<vmem>>, vector<1x1xf32>
    %15 = vector.broadcast %14 : vector<1x1xf32> to vector<1x8xf32>
    %16 = arith.addf %13, %15 : vector<1x8xf32>
    %cst_11 = arith.constant 0.000000e+00 : f32
    %17 = vector.broadcast %cst_11 : f32 to vector<1x8xf32>
    %18 = arith.maximumf %16, %17 : vector<1x8xf32>
    %c0_12 = arith.constant 0 : index
    %c0_13 = arith.constant 0 : index
    %19 = vector.load %arg6[%c0_12, %c0_13] : memref<1x8xf32, #tpu.memory_space<vmem>>, vector<1x8xf32>
    tpu.vector_store %arg6[%c0_12, %c0_13], %18 {strides = array<i32>} : memref<1x8xf32, #tpu.memory_space<vmem>>, vector<1x8xf32>,
    return
  }
  func.func @transform_0(%arg0: i32) -> (i32, i32) {
    %c0_i32 = arith.constant 0 : i32
    %c0_i32_0 = arith.constant 0 : i32
    return %arg0, %c0_i32 : i32, i32
  }
  func.func @transform_1(%arg0: i32) -> (i32, i32) {
    %c0_i32 = arith.constant 0 : i32
    %c0_i32_0 = arith.constant 0 : i32
    %c0_i32_1 = arith.constant 0 : i32
    return %c0_i32, %c0_i32_0 : i32, i32
  }
  func.func @transform_2(%arg0: i32) -> (i32, i32) {
    %c0_i32 = arith.constant 0 : i32
    %c0_i32_0 = arith.constant 0 : i32
    %c0_i32_1 = arith.constant 0 : i32
    return %c0_i32, %c0_i32_0 : i32, i32
  }
  func.func @transform_3(%arg0: i32) -> (i32, i32) {
    %c0_i32 = arith.constant 0 : i32
    %c0_i32_0 = arith.constant 0 : i32
    %c0_i32_1 = arith.constant 0 : i32
    return %c0_i32, %c0_i32_0 : i32, i32
  }
  func.func @transform_4(%arg0: i32) -> (i32, i32) {
    %c0_i32 = arith.constant 0 : i32
    %c0_i32_0 = arith.constant 0 : i32
    %c0_i32_1 = arith.constant 0 : i32
    return %c0_i32, %c0_i32_0 : i32, i32
  }
  func.func @transform_5(%arg0: i32) -> (i32, i32) {
    %c0_i32 = arith.constant 0 : i32
    %c0_i32_0 = arith.constant 0 : i32
    return %c0_i32, %arg0 : i32, i32
  }
}

</mosaic_0001>

<llo_original>
// kernel: tpu_custom_call.1
$region0: #{tpu_custom_call.1}
  #allocation0 [shape = 'u32[]', space=smem, size = 0x4, offset = 0x4, fixed_abs, tag = 'smem constant byte address 0x4 - core index']
  #allocation1 [shape = 'u32[144,128]{1,0:T(1,128)}', space=vmem, size = 0x12000, scoped, tag = 'internal scratch']
  #allocation2 [shape = 'f32[1,1]{1,0:T(1,128)S(1)}', space=vmem, size = 0x200, scoped, tag = 'scoped memory for tpu_custom_call.1']
  %s0 = inlined_call_operand.vmem [shape: f32[8,20], index: 0, kind: input, shape index: {}]
  %s1 = inlined_call_operand.vmem [shape: f32[20,20], index: 1, kind: input, shape index: {}]
  %s2 = inlined_call_operand.vmem [shape: f32[20,1], index: 2, kind: input, shape index: {}]
  %s3 = inlined_call_operand.vmem [shape: f32[20,1], index: 3, kind: input, shape index: {}]
  %s4 = inlined_call_operand.<no memory space> [shape: f32[1,1], index: 4, kind: input, shape index: {}]
  %s5 = inlined_call_operand.hbm [shape: f32[1,8], index: 5, kind: output, shape index: {}]
  %s6 = sld [smem:[#allocation0]]
  $region30: #{tpu_custom_call.1} parent=0
    _
  %s8 = ssub.s32 1, %s6
  %s9 = scalar_select 0, %s8, %s6
  %v10 = vstv %s4
  %11 = vst [vmem:[#allocation2] sm:$0x1] %v10
  $region1: #{tpu_custom_call.1} parent=0
    #allocation3 [shape = 'u8[512]{0}', space=vmem, size = 0x400, scoped, tag = 'output window, operand 0, single buffered']
    #allocation4 [shape = 's32[1]{0}', space=sflag, size = 0x4, scoped, tag = 'scoped memory for tpu_custom_call.1']
    %12 = vsyncpa [#allocation4], 0
    // Predicated region
    $region2: #{tpu_custom_call.1} parent=1 // pred_check
      _
    $region3: #{tpu_custom_call.1} parent=1 // pred_check_branch
      %14 = sbr.rel (0) target = $region5
    $region4: #{tpu_custom_call.1} parent=1 // pred_region
      _
    $region5: #{tpu_custom_call.1} parent=1 // pred_fallthru
      _
    // Predicated region
    $region6: #{tpu_custom_call.1} parent=1 // pred_check
      _
    $region7: #{tpu_custom_call.1} parent=1 // pred_check_branch
      %16 = sbr.rel (0) target = $region9
    $region8: #{tpu_custom_call.1} parent=1 // pred_region
      _
    $region9: #{tpu_custom_call.1} parent=1 // pred_fallthru
      _
    // Predicated region
    $region10: #{tpu_custom_call.1} parent=1 // pred_check
      _
    $region11: #{tpu_custom_call.1} parent=1 // pred_check_branch
      %18 = sbr.rel (0) target = $region13
    $region12: #{tpu_custom_call.1} parent=1 // pred_region
      _
    $region13: #{tpu_custom_call.1} parent=1 // pred_fallthru
      _
    // Predicated region
    $region14: #{tpu_custom_call.1} parent=1 // pred_check
      _
    $region15: #{tpu_custom_call.1} parent=1 // pred_check_branch
      %20 = sbr.rel (0) target = $region17
    $region16: #{tpu_custom_call.1} parent=1 // pred_region
      _
    $region17: #{tpu_custom_call.1} parent=1 // pred_fallthru
      _
    // Predicated region
    $region18: #{tpu_custom_call.1} parent=1 // pred_check
      _
    $region19: #{tpu_custom_call.1} parent=1 // pred_check_branch
      %22 = sbr.rel (0) target = $region21
    $region20: #{tpu_custom_call.1} parent=1 // pred_region
      _
    $region21: #{tpu_custom_call.1} parent=1 // pred_fallthru
      _
    %v23 = vld [vmem:[%s1] sm:$0xff]
    %v24 = vld [vmem:[%s1 + $0x8] sm:$0xff]
    %v25 = vld [vmem:[%s1 + $0x10] sm:$0xf]
    %v26 = vld [vmem:[%s0] sm:$0xff]
    %v27 = vld [vmem:[%s2] sm:$0xff]
    %v28 = vld [vmem:[%s2 + $0x8] sm:$0xff]
    %v29 = vld [vmem:[%s2 + $0x10] sm:$0xf]
    %31 = vset.pattern.permute.xlu0 0
    %32 = vperm.xlu0 %31, %v27
    %v33 = vpop.permute.xlu0 %32
    %36 = vset.pattern.permute.xlu0 0
    %37 = vperm.xlu0 %36, %v28
    %v38 = vpop.permute.xlu0 %37
    %41 = vset.pattern.permute.xlu0 0
    %42 = vperm.xlu0 %41, %v29
    %v43 = vpop.permute.xlu0 %42
    %vm45 = vcmask 162816
    %v47 = vsel %vm45, %v23, 0
    %v50 = vsel %vm45, %v24, 0
    %v53 = vsel %vm45, %v25, 0
    %v56 = vsel %vm45, %v26, 0
    %58 = vmatprep.subr.mxu0 0.0
    %59 = vmatpush1.xpose.msra.mxu0 0.0
    %60 = vmatprep.subr.mxu0 0.0
    %61 = vmatpush1.xpose.msra.mxu0 0.0
    %62 = vmatprep.subr.mxu0 0.0
    %63 = vmatpush1.xpose.msra.mxu0 0.0
    %64 = vmatprep.subr.mxu0 0.0
    %65 = vmatpush1.xpose.msra.mxu0 0.0
    %66 = vmatprep.subr.mxu0 0.0
    %67 = vmatpush1.xpose.msra.mxu0 0.0
    %68 = vmatprep.subr.mxu0 0.0
    %69 = vmatpush1.xpose.msra.mxu0 0.0
    %70 = vmatprep.subr.mxu0 0.0
    %71 = vmatpush1.xpose.msra.mxu0 0.0
    %72 = vmatprep.subr.mxu0 0.0
    %73 = vmatpush1.xpose.msra.mxu0 0.0
    %74 = vmatprep.subr.mxu0 0.0
    %75 = vmatpush1.xpose.msra.mxu0 0.0
    %76 = vmatprep.subr.mxu0 0.0
    %77 = vmatpush1.xpose.msra.mxu0 0.0
    %78 = vmatprep.subr.mxu0 0.0
    %79 = vmatpush1.xpose.msra.mxu0 0.0
    %80 = vmatprep.subr.mxu0 0.0
    %81 = vmatpush1.xpose.msra.mxu0 0.0
    %82 = vmatprep.subr.mxu0 0.0
    %83 = vmatpush1.xpose.msra.mxu0 0.0
    %84 = vmatprep.subr.mxu0 0.0
    %85 = vmatpush1.xpose.msra.mxu0 0.0
    %86 = vmatprep.subr.mxu0 0.0
    %87 = vmatpush1.xpose.msra.mxu0 0.0
    %88 = vmatprep.subr.mxu0 0.0
    %89 = vmatpush1.xpose.msra.mxu0 %v56
    %90 = vmatprep.subr.mxu0 0.0
    %91 = vmatpush2.xpose.msra.mxu0 0.0
    %92 = vmatprep.subr.mxu0 0.0
    %93 = vmatpush2.xpose.msra.mxu0 0.0
    %94 = vmatprep.subr.mxu0 0.0
    %95 = vmatpush2.xpose.msra.mxu0 0.0
    %96 = vmatprep.subr.mxu0 0.0
    %97 = vmatpush2.xpose.msra.mxu0 0.0
    %98 = vmatprep.subr.mxu0 0.0
    %99 = vmatpush2.xpose.msra.mxu0 0.0
    %100 = vmatprep.subr.mxu0 0.0
    %101 = vmatpush2.xpose.msra.mxu0 0.0
    %102 = vmatprep.subr.mxu0 0.0
    %103 = vmatpush2.xpose.msra.mxu0 0.0
    %104 = vmatprep.subr.mxu0 0.0
    %105 = vmatpush2.xpose.msra.mxu0 0.0
    %106 = vmatprep.subr.mxu0 0.0
    %107 = vmatpush2.xpose.msra.mxu0 0.0
    %108 = vmatprep.subr.mxu0 0.0
    %109 = vmatpush2.xpose.msra.mxu0 0.0
    %110 = vmatprep.subr.mxu0 0.0
    %111 = vmatpush2.xpose.msra.mxu0 0.0
    %112 = vmatprep.subr.mxu0 0.0
    %113 = vmatpush2.xpose.msra.mxu0 0.0
    %114 = vmatprep.subr.mxu0 0.0
    %115 = vmatpush2.xpose.msra.mxu0 0.0
    %116 = vmatprep.subr.mxu0 0.0
    %117 = vmatpush2.xpose.msra.mxu0 0.0
    %118 = vmatprep.subr.mxu0 0.0
    %119 = vmatpush2.xpose.msra.mxu0 0.0
    %120 = vmatprep.subr.mxu0 0.0
    %121 = vmatpush2.xpose.msra.mxu0 0.0
    %122 = vmatprep.mubr.f32.mxu0 0.0
    %123 = vmatmul.mubr.f32.gmra.mxu0 %v47
    %v124 = vpop.f32.mrf.mxu0
    %v125 = vadd.f32 %v33, %v124
    %v126 = vpop.f32.mrf.mxu0
    %127 = vmatprep.mubr.f32.mxu0 0.0
    %128 = vmatmul.mubr.f32.gmra.mxu0 %v50
    %v129 = vpop.f32.mrf.mxu0
    %v130 = vadd.f32 %v38, %v129
    %v131 = vpop.f32.mrf.mxu0
    %132 = vmatprep.mubr.f32.mxu0 0.0
    %133 = vmatmul.mubr.f32.gmra.mxu0 %v53
    %v134 = vpop.f32.mrf.mxu0
    %v135 = vadd.f32 %v43, %v134
    %v136 = vpop.f32.mrf.mxu0
    %137 = vdwg.mxu0
    %v138 = vmax.f32 %v125, 0.0
    %v139 = vmax.f32 %v130, 0.0
    %v140 = vmax.f32 %v135, 0.0
    %v141 = vld [vmem:[%s3] sm:$0xff]
    %v142 = vld [vmem:[%s3 + $0x8] sm:$0xff]
    %v143 = vld [vmem:[%s3 + $0x10] sm:$0xf]
    %145 = vset.pattern.permute.xlu0 0
    %146 = vperm.xlu0 %145, %v141
    %v147 = vpop.permute.xlu0 %146
    %150 = vset.pattern.permute.xlu0 0
    %151 = vperm.xlu0 %150, %v142
    %v152 = vpop.permute.xlu0 %151
    %155 = vset.pattern.permute.xlu0 0
    %156 = vperm.xlu0 %155, %v143
    %v157 = vpop.permute.xlu0 %156
    %v159 = vmul.f32 %v138, %v147
    %v160 = vmul.f32 %v139, %v152
    %v161 = vmul.f32 %v140, %v157
    %vm162 = vcmask 64512
    %v163 = vsel %vm162, %v159, 0.0
    %v164 = vsel %vm162, %v160, 0.0
    %v165 = vadd.f32 %v163, %v164
    %vm166 = vcmask 60416
    %v167 = vsel %vm166, %v161, 0.0
    %v168 = vadd.f32 %v165, %v167
    %v169 = vrot.slane %v168, 4
    %v170 = vadd.f32 %v168, %v169
    %v171 = vrot.slane %v170, 2
    %v172 = vadd.f32 %v170, %v171
    %v173 = vrot.slane %v172, 1
    %v174 = vadd.f32 %v172, %v173
    %v175 = vld [vmem:[#allocation2] sm:$0x1]
    %177 = vset.pattern.permute.xlu0 0
    %178 = vperm.xlu0 %177, %v175
    %v179 = vpop.permute.xlu0 %178
    %v181 = vlaneseq
    %v182 = vshrl.u32 %v181, 7
    %v183 = vsub.s32 0, %v182
    %v184 = vrot.slane %v179, %v183
    %v185 = vadd.f32 %v174, %v184
    %v186 = vmax.f32 %v185, 0.0
    %vm187 = vcmask 57344
    %188 = vst.msk [vmem:[#allocation3] sm:$0x1] %vm187, %v186
    // Predicated region
    $region22: #{tpu_custom_call.1} parent=1 // pred_check
      _
    $region23: #{tpu_custom_call.1} parent=1 // pred_check_branch
      %190 = sbr.rel (0) target = $region25
    $region24: #{tpu_custom_call.1} parent=1 // pred_region
      %s192 = ssub.s32 16, 16
      %193 = vsyncadd [#allocation4], %s192
      %s195 = sshll.u32 [#allocation3], 4
      %s196 = int_to_ptr.vmem [resolvable:$true] %s195
      %198 = dma.vmem_to_hbm [thread:$0]  %s196, 16, %s5, [#allocation4]
    $region25: #{tpu_custom_call.1} parent=1 // pred_fallthru
      _
    // Predicated region
    $region26: #{tpu_custom_call.1} parent=1 // pred_check
      _
    $region27: #{tpu_custom_call.1} parent=1 // pred_check_branch
      %200 = sbr.rel (0) target = $region29
    $region28: #{tpu_custom_call.1} parent=1 // pred_region
      %201 = dma.done [#allocation4], 16
    $region29: #{tpu_custom_call.1} parent=1 // pred_fallthru
      _
    %202 = vsyncpa [#allocation4], 1

</llo_original>
